<compile_context>
chip_gen: v5e
topology: v5e:2x2
jax: 0.10.0
libtpu: 0.0.40
codegen_flags: <defaults>
</compile_context>

<pallas_src>
import jax
import jax.numpy as jnp
from jax.experimental import pallas as pl
from jax.experimental.pallas import tpu as pltpu


# 4096 rows * 128 batch/row = 524288 batch elements per grid step.
# VMEM: 2 * (4096*256*4 + 4096*128*4) bytes + 128 KiB weights ~= 12.4 MiB.
_MAX_TILE_ROWS = 4096


def _affine_kernel(b_ref, x_ref, w_ref, o_ref):
    """b_ref: SMEM (1,) f32 folded bias.
       x_ref: VMEM (tr, 256) interleaved [x0, x1, x0, x1, ...] batch tile.
       w_ref: VMEM (256, 128) constant deinterleave+affine matrix.
       o_ref: VMEM (tr, 128) lane-dense output tile (batch on lanes).
    """
    acc = jnp.dot(x_ref[...], w_ref[...], preferred_element_type=jnp.float32)
    o_ref[...] = (acc + b_ref[0]).astype(o_ref.dtype)


def _round_up(n, m):
    return ((n + m - 1) // m) * m


def _choose_tile_rows(rows):
    if rows <= 8:
        return rows                                   # single full-extent block
    # Keep >= 2 grid steps so v7x's two TensorCores can each take tiles.
    return min(_MAX_TILE_ROWS, _round_up(pl.cdiv(rows, 2), 8))


def _simplemodel_forward_impl(x, w1, b1, w2, b2):
    """x: [B, 2]; w1: [2, 128]; b1: [1, 128]; w2: [128, 1]; b2: [1, 1] -> [B, 1]."""
    B = x.shape[0]
    out_dtype = x.dtype

    # ---- weight folding (exact in eval mode; dropout == identity) ----
    w_eff = (w1.astype(jnp.float32) @ w2.astype(jnp.float32)).reshape(2)       # [2]
    b_eff = (b1.astype(jnp.float32) @ w2.astype(jnp.float32)
             + b2.astype(jnp.float32)).reshape(1)                              # [1]

    # Deinterleave + affine matrix: W[2j + c, j] = w_eff[c]; zeros elsewhere.
    eye = jnp.eye(128, dtype=jnp.float32)
    w_mat = jnp.stack([w_eff[0] * eye, w_eff[1] * eye], axis=1).reshape(256, 128)
    w_mat = w_mat.astype(x.dtype)     # bf16 callers get the native bf16 MXU path

    # ---- zero-copy relayout: [B, 2] (row-major) -> [rows, 256] interleaved ----
    b_pad = _round_up(B, 128)
    if b_pad != B:                    # only copies when B is not 128-aligned
        x = jnp.pad(x, ((0, b_pad - B), (0, 0)))
    rows = b_pad // 128
    x2d = x.reshape(rows, 256)        # pure metadata reshape, no HBM movement

    tr = _choose_tile_rows(rows)
    grid = (pl.cdiv(rows, tr),)

    itemsize = jnp.dtype(x.dtype).itemsize
    cost = pl.CostEstimate(
        flops=2 * rows * 128 * 256,
        transcendentals=0,
        bytes_accessed=(rows * 256 * itemsize                      # x
                        + 256 * 128 * itemsize                     # w_mat
                        + rows * 128 * jnp.dtype(out_dtype).itemsize))  # out

    out2d = pl.pallas_call(
        _affine_kernel,
        out_shape=jax.ShapeDtypeStruct((rows, 128), out_dtype),
        grid=grid,
        in_specs=[
            # Folded bias scalar lives in SMEM.
            pl.BlockSpec(memory_space=pltpu.MemorySpace.SMEM),
            # Large batch tile, auto double-buffered.
            pl.BlockSpec((tr, 256), lambda i: (i, 0)),
            # Constant weight block: fetched once, resident across the grid.
            pl.BlockSpec((256, 128), lambda i: (0, 0)),
        ],
        out_specs=pl.BlockSpec((tr, 128), lambda i: (i, 0)),
        compiler_params=pltpu.CompilerParams(
            # Batch tiles are independent -> shard across v7x's 2 TensorCores.
            dimension_semantics=("parallel",),
            # Explicit limit: safe on v5e (16 MiB scoped default, 128 MiB phys)
            # and within v7x's 64 MiB physical VMEM.
            vmem_limit_bytes=32 * 1024 * 1024),
        cost_estimate=cost,
    )(b_eff, x2d, w_mat)

    # Lane-dense [rows, 128] flattens straight back to batch order.
    return out2d.reshape(b_pad, 1)[:B]


# Single jit so the (optional) pad and the final slice/reshape fuse into one
# pre-pass / post-pass around the kernel.
simplemodel_forward = jax.jit(_simplemodel_forward_impl)


def init_params(key):
    # Deterministic init mimicking nn.Linear's U(-1/sqrt(fan_in), 1/sqrt(fan_in)).
    k1, k2, k3, k4 = jax.random.split(key, 4)
    lim1 = 1.0 / jnp.sqrt(2.0)
    lim2 = 1.0 / jnp.sqrt(128.0)
    w1 = jax.random.uniform(k1, (2, 128), jnp.float32, -lim1, lim1)
    b1 = jax.random.uniform(k2, (1, 128), jnp.float32, -lim1, lim1)
    w2 = jax.random.uniform(k3, (128, 1), jnp.float32, -lim2, lim2)
    b2 = jax.random.uniform(k4, (1, 1), jnp.float32, -lim2, lim2)
    return w1, b1, w2, b2


if __name__ == "__main__":
    key = jax.random.PRNGKey(0)
    k_x, k_p = jax.random.split(key)

    B = 8
    x = jax.random.normal(k_x, (B, 2), jnp.float32)
    w1, b1, w2, b2 = init_params(k_p)

    out = simplemodel_forward(x, w1, b1, w2, b2)
    jax.block_until_ready(out)

    # Reference in plain JAX (eval-mode dropout == identity).  Tolerance is a
    # little loose because the folded-weight + MXU path reorders roundings.
    ref = (x @ w1 + b1) @ w2 + b2
    assert out.shape == (B, 1), out.shape
    assert jnp.allclose(out, ref, atol=2e-3, rtol=2e-3), (out, ref)

    print("KERNEL_OK")
</pallas_src>

<mosaic_0001>
module attributes {stable_mosaic.version = 11 : i64} {
  func.func @_affine_kernel(%arg0: i32, %arg1: memref<1xf32, #tpu.memory_space<smem>>, %arg2: memref<1x256xf32, #tpu.memory_space<vmem>>, %arg3: memref<256x128xf32, #tpu.memory_space<vmem>>, %arg4: memref<1x128xf32, #tpu.memory_space<vmem>>) attributes {dimension_semantics = [#tpu.dimension_semantics<parallel>], iteration_bounds = array<i64: 1>, scalar_prefetch = 0 : i64, scratch_operands = 0 : i64, tpu.core_type = #tpu.core_type<tc>, window_params = [{transform_indices = @transform_0, window_bounds = array<i64: 1>}, {transform_indices = @transform_1, window_bounds = array<i64: 1, 256>}, {pipeline_mode = #tpu.pipeline_mode<synchronous>, transform_indices = @transform_2, window_bounds = array<i64: 256, 128>}, {transform_indices = @transform_3, window_bounds = array<i64: 1, 128>}]} {
    %c0 = arith.constant 0 : index
    %c0_0 = arith.constant 0 : index
    %0 = vector.load %arg2[%c0, %c0_0] : memref<1x256xf32, #tpu.memory_space<vmem>>, vector<1x256xf32>
    %c0_1 = arith.constant 0 : index
    %c0_2 = arith.constant 0 : index
    %1 = vector.load %arg3[%c0_1, %c0_2] : memref<256x128xf32, #tpu.memory_space<vmem>>, vector<256x128xf32>
    %cst = arith.constant dense<0.000000e+00> : vector<1x128xf32>
    %2 = tpu.matmul %0, %1, %cst {dimension_numbers = #tpu.dot_dimension_numbers<[1], [0], [0], [1], [0, 0, 1, 1], [], []>} : vector<1x256xf32>, vector<256x128xf32>, vector<1x128xf32> -> vector<1x128xf32>
    %c0_3 = arith.constant 0 : index
    %3 = memref.load %arg1[%c0_3] : memref<1xf32, #tpu.memory_space<smem>>
    %4 = vector.broadcast %3 : f32 to vector<1x128xf32>
    %5 = arith.addf %2, %4 : vector<1x128xf32>
    %c0_4 = arith.constant 0 : index
    %c0_5 = arith.constant 0 : index
    %6 = vector.load %arg4[%c0_4, %c0_5] : memref<1x128xf32, #tpu.memory_space<vmem>>, vector<1x128xf32>
    tpu.vector_store %arg4[%c0_4, %c0_5], %5 {strides = array<i32>} : memref<1x128xf32, #tpu.memory_space<vmem>>, vector<1x128xf32>,
    return
  }
  func.func @transform_0(%arg0: i32) -> i32 {
    %c0_i32 = arith.constant 0 : i32
    %c0_i32_0 = arith.constant 0 : i32
    return %c0_i32 : i32
  }
  func.func @transform_1(%arg0: i32) -> (i32, i32) {
    %c0_i32 = arith.constant 0 : i32
    %c0_i32_0 = arith.constant 0 : i32
    return %arg0, %c0_i32 : i32, i32
  }
  func.func @transform_2(%arg0: i32) -> (i32, i32) {
    %c0_i32 = arith.constant 0 : i32
    %c0_i32_0 = arith.constant 0 : i32
    %c0_i32_1 = arith.constant 0 : i32
    return %c0_i32, %c0_i32_0 : i32, i32
  }
  func.func @transform_3(%arg0: i32) -> (i32, i32) {
    %c0_i32 = arith.constant 0 : i32
    %c0_i32_0 = arith.constant 0 : i32
    return %arg0, %c0_i32 : i32, i32
  }
}

</mosaic_0001>

<llo_original>
// kernel: _simplemodel_forward_impl.1
$region0: #{_simplemodel_forward_impl.1}
  #allocation0 [shape = 'u32[]', space=smem, size = 0x4, offset = 0x4, fixed_abs, tag = 'smem constant byte address 0x4 - core index']
  #allocation1 [shape = 'u32[72,128]{1,0:T(1,128)}', space=vmem, size = 0x9000, scoped, tag = 'internal scratch']
  #allocation2 [shape = 'f32[1]{0:T(128)S(6)}', space=smem, size = 0x200, scoped, tag = 'scoped memory for _simplemodel_forward_impl.1']
  %s0 = inlined_call_operand.<no memory space> [shape: f32[1], index: 0, kind: input, shape index: {}]
  %s1 = inlined_call_operand.vmem [shape: f32[1,256], index: 1, kind: input, shape index: {}]
  %s2 = inlined_call_operand.vmem [shape: f32[256,128], index: 2, kind: input, shape index: {}]
  %s3 = inlined_call_operand.vmem [shape: f32[1,128], index: 3, kind: output, shape index: {}]
  %s4 = sld [smem:[#allocation0]]
  $region22: #{_simplemodel_forward_impl.1} parent=0
    _
  %s6 = ssub.s32 1, %s4
  %s7 = scalar_select 0, %s6, %s4
  %8 = sst [smem:[#allocation2]] %s0
  // Predicated region
  $region2: #{_simplemodel_forward_impl.1} parent=0 // pred_check
    _
  $region3: #{_simplemodel_forward_impl.1} parent=0 // pred_check_branch
    %10 = sbr.rel (0) target = $region5
  $region4: #{_simplemodel_forward_impl.1} parent=0 // pred_region
    _
  $region5: #{_simplemodel_forward_impl.1} parent=0 // pred_fallthru
    _
  // Predicated region
  $region6: #{_simplemodel_forward_impl.1} parent=0 // pred_check
    _
  $region7: #{_simplemodel_forward_impl.1} parent=0 // pred_check_branch
    %12 = sbr.rel (0) target = $region9
  $region8: #{_simplemodel_forward_impl.1} parent=0 // pred_region
    _
  $region9: #{_simplemodel_forward_impl.1} parent=0 // pred_fallthru
    _
  // Predicated region
  $region10: #{_simplemodel_forward_impl.1} parent=0 // pred_check
    _
  $region11: #{_simplemodel_forward_impl.1} parent=0 // pred_check_branch
    %14 = sbr.rel (0) target = $region13
  $region12: #{_simplemodel_forward_impl.1} parent=0 // pred_region
    _
  $region13: #{_simplemodel_forward_impl.1} parent=0 // pred_fallthru
    _
  %v15 = vld [vmem:[%s1] sm:$0x3]
  %v16 = vld [vmem:[%s2] sm:$0xff]
  %v17 = vld [vmem:[%s2 + $0x8] sm:$0xff]
  %v18 = vld [vmem:[%s2 + $0x10] sm:$0xff]
  %v19 = vld [vmem:[%s2 + $0x18] sm:$0xff]
  %v20 = vld [vmem:[%s2 + $0x20] sm:$0xff]
  %v21 = vld [vmem:[%s2 + $0x28] sm:$0xff]
  %v22 = vld [vmem:[%s2 + $0x30] sm:$0xff]
  %v23 = vld [vmem:[%s2 + $0x38] sm:$0xff]
  %v24 = vld [vmem:[%s2 + $0x40] sm:$0xff]
  %v25 = vld [vmem:[%s2 + $0x48] sm:$0xff]
  %v26 = vld [vmem:[%s2 + $0x50] sm:$0xff]
  %v27 = vld [vmem:[%s2 + $0x58] sm:$0xff]
  %v28 = vld [vmem:[%s2 + $0x60] sm:$0xff]
  %v29 = vld [vmem:[%s2 + $0x68] sm:$0xff]
  %v30 = vld [vmem:[%s2 + $0x70] sm:$0xff]
  %v31 = vld [vmem:[%s2 + $0x78] sm:$0xff]
  %v32 = vld [vmem:[%s2 + $0x80] sm:$0xff]
  %v33 = vld [vmem:[%s2 + $0x88] sm:$0xff]
  %v34 = vld [vmem:[%s2 + $0x90] sm:$0xff]
  %v35 = vld [vmem:[%s2 + $0x98] sm:$0xff]
  %v36 = vld [vmem:[%s2 + $0xa0] sm:$0xff]
  %v37 = vld [vmem:[%s2 + $0xa8] sm:$0xff]
  %v38 = vld [vmem:[%s2 + $0xb0] sm:$0xff]
  %v39 = vld [vmem:[%s2 + $0xb8] sm:$0xff]
  %v40 = vld [vmem:[%s2 + $0xc0] sm:$0xff]
  %v41 = vld [vmem:[%s2 + $0xc8] sm:$0xff]
  %v42 = vld [vmem:[%s2 + $0xd0] sm:$0xff]
  %v43 = vld [vmem:[%s2 + $0xd8] sm:$0xff]
  %v44 = vld [vmem:[%s2 + $0xe0] sm:$0xff]
  %v45 = vld [vmem:[%s2 + $0xe8] sm:$0xff]
  %v46 = vld [vmem:[%s2 + $0xf0] sm:$0xff]
  %v47 = vld [vmem:[%s2 + $0xf8] sm:$0xff]
  %s48 = sld [smem:[#allocation2]]
  %v49 = vstv %s48
  %v51 = vperm.slane %v15, 0
  %v52 = vperm.slane %v15, 1
  %55 = vmatpush.msra.mxu0 %v31
  %56 = vmatpush.msra.mxu0 %v30
  %57 = vmatpush.msra.mxu0 %v29
  %58 = vmatpush.msra.mxu0 %v28
  %59 = vmatpush.msra.mxu0 %v27
  %60 = vmatpush.msra.mxu0 %v26
  %61 = vmatpush.msra.mxu0 %v25
  %62 = vmatpush.msra.mxu0 %v24
  %63 = vmatpush.msra.mxu0 %v23
  %64 = vmatpush.msra.mxu0 %v22
  %65 = vmatpush.msra.mxu0 %v21
  %66 = vmatpush.msra.mxu0 %v20
  %67 = vmatpush.msra.mxu0 %v19
  %68 = vmatpush.msra.mxu0 %v18
  %69 = vmatpush.msra.mxu0 %v17
  %70 = vmatpush.msra.mxu0 %v16
  %71 = vmatmul.f32.gmra.mxu0 %v51
  %v72 = vpop.f32.mrf.mxu0
  %v73 = vadd.f32 %v49, %v72
  %74 = vdwg.mxu0
  %75 = vmatpush.msra.mxu0 %v47
  %76 = vmatpush.msra.mxu0 %v46
  %77 = vmatpush.msra.mxu0 %v45
  %78 = vmatpush.msra.mxu0 %v44
  %79 = vmatpush.msra.mxu0 %v43
  %80 = vmatpush.msra.mxu0 %v42
  %81 = vmatpush.msra.mxu0 %v41
  %82 = vmatpush.msra.mxu0 %v40
  %83 = vmatpush.msra.mxu0 %v39
  %84 = vmatpush.msra.mxu0 %v38
  %85 = vmatpush.msra.mxu0 %v37
  %86 = vmatpush.msra.mxu0 %v36
  %87 = vmatpush.msra.mxu0 %v35
  %88 = vmatpush.msra.mxu0 %v34
  %89 = vmatpush.msra.mxu0 %v33
  %90 = vmatpush.msra.mxu0 %v32
  %91 = vmatmul.f32.gmra.mxu0 %v52
  %v92 = vpop.f32.mrf.mxu0
  %v93 = vadd.f32 %v73, %v92
  %94 = vdwg.mxu0
  %95 = vst [vmem:[%s3] sm:$0x1] %v93
  // Predicated region
  $region14: #{_simplemodel_forward_impl.1} parent=0 // pred_check
    _
  $region15: #{_simplemodel_forward_impl.1} parent=0 // pred_check_branch
    %97 = sbr.rel (0) target = $region17
  $region16: #{_simplemodel_forward_impl.1} parent=0 // pred_region
    _
  $region17: #{_simplemodel_forward_impl.1} parent=0 // pred_fallthru
    _
  // Predicated region
  $region18: #{_simplemodel_forward_impl.1} parent=0 // pred_check
    _
  $region19: #{_simplemodel_forward_impl.1} parent=0 // pred_check_branch
    %99 = sbr.rel (0) target = $region21
  $region20: #{_simplemodel_forward_impl.1} parent=0 // pred_region
    _
  $region21: #{_simplemodel_forward_impl.1} parent=0 // pred_fallthru
    _

</llo_original>
